<compile_context>
chip_gen: v7x
topology: tpu7x:2x2x1
jax: 0.10.0
libtpu: 0.0.40
codegen_flags: <defaults>
</compile_context>

<pallas_src>
import jax
import jax.numpy as jnp
import numpy as np
from jax import lax
from jax.experimental import pallas as pl
from jax.experimental.pallas import tpu as pltpu

EPS = 1e-5
LANE = 128


def _round_up(x, m):
    return -(-x // m) * m


def _vmem_limit_bytes():
    # Never request all of physical VMEM (v7x has only 64 MiB per TensorCore); leave
    # headroom for compiler-internal scratch and double buffers.
    try:
        cap = int(pltpu.get_tpu_info().vmem_capacity_bytes)
        return max(cap * 3 // 4, 32 * 1024 * 1024)
    except Exception:
        return 48 * 1024 * 1024


def _make_block_kernel(N, L, Cin_p, P_p, stride, has_shortcut, pad1_dt, pad2_dt):
    """conv1(k3,s,p1)+bn1+relu -> conv2(k3,1,p1)+bn2 -> (+shortcut) -> relu, fused."""
    L_out = (L - 1) // stride + 1
    M = N * L_out
    inv_cnt = 1.0 / float(M)            # BN statistic count (over batch and length)

    def tap(pad_ref, k, s, width):
        # slab row r holds x[r-2]; output t, tap k needs x[s*t + k - 1] == row s*t + k + 1
        if s == 1:
            t = pad_ref[:, k + 1:k + 1 + L_out, :]
        else:
            t = pad_ref[:, pl.ds(k + 1, L_out, stride=s), :]
        return t.reshape(M, width).astype(jnp.bfloat16)   # no-op cast on a bf16 slab

    def conv3(taps, w_ref):
        # three accumulated MXU dots, f32 accumulation; no (M, 3C) concat materialization
        y = jnp.dot(taps[0], w_ref[0], preferred_element_type=jnp.float32)
        y += jnp.dot(taps[1], w_ref[1], preferred_element_type=jnp.float32)
        y += jnp.dot(taps[2], w_ref[2], preferred_element_type=jnp.float32)
        return y

    def batchnorm(y, g_ref, b_ref):
        # training-mode BN, single reduction pass; clamped variance; precombined FMA
        s1 = jnp.sum(y, axis=0, keepdims=True)             # (1, C)
        s2 = jnp.sum(y * y, axis=0, keepdims=True)         # (1, C)
        mean = s1 * inv_cnt
        var = jnp.maximum(s2 * inv_cnt - mean * mean, 0.0)  # biased, clamped
        scale = g_ref[...] * lax.rsqrt(var + EPS)
        shift = b_ref[...] - mean * scale
        return y * scale + shift

    def kernel(*refs):
        if has_shortcut:
            (x_ref, w1_ref, g1_ref, b1_ref, w2_ref, g2_ref, b2_ref,
             wsc_ref, gsc_ref, bsc_ref, o_ref, pad1_ref, pad2_ref) = refs
        else:
            (x_ref, w1_ref, g1_ref, b1_ref, w2_ref, g2_ref, b2_ref,
             o_ref, pad1_ref, pad2_ref) = refs

        # ---- pad1: zero borders, DMA x (HBM) straight into the interior (rows 2..L+1) ----
        zb1 = jnp.zeros((N, 2, Cin_p), pad1_dt)
        pad1_ref[:, 0:2, :] = zb1
        pad1_ref[:, L + 2:L + 4, :] = zb1
        pltpu.sync_copy(x_ref, pad1_ref.at[:, 2:L + 2, :])

        # ---- conv1 (stride folded into the taps) + bn1 + relu ----
        taps1 = [tap(pad1_ref, k, stride, Cin_p) for k in range(3)]
        h = jnp.maximum(batchnorm(conv3(taps1, w1_ref), g1_ref, b1_ref), 0.0)

        # ---- pad2: zero borders, store h once (cast as it is stored) ----
        zb2 = jnp.zeros((N, 2, P_p), pad2_dt)
        pad2_ref[:, 0:2, :] = zb2
        pad2_ref[:, L_out + 2:L_out + 4, :] = zb2
        pad2_ref[:, 2:L_out + 2, :] = h.reshape(N, L_out, P_p).astype(pad2_dt)

        # ---- conv2 (stride 1) + bn2 ----
        taps2 = [tap(pad2_ref, k, 1, P_p) for k in range(3)]
        y2 = batchnorm(conv3(taps2, w2_ref), g2_ref, b2_ref)

        # ---- shortcut (reuses conv1's middle tap: that gather is done exactly once) ----
        if has_shortcut:
            sc = jnp.dot(taps1[1], wsc_ref[...], preferred_element_type=jnp.float32)
            sc = batchnorm(sc, gsc_ref, bsc_ref)
        else:
            sc = taps1[1].astype(jnp.float32)               # identity: rows 2..L+1 == x

        out = jnp.maximum(y2 + sc, 0.0)
        o_ref[...] = out.reshape(N, L_out, P_p).astype(o_ref.dtype)

    return kernel, L_out


def basic_block_1d(x_ncl, params, stride):
    """Pallas implementation of BasicBlock1D.forward (training-mode BN). x: (N, Cin, L)."""
    N, Cin, L = x_ncl.shape
    P = params["conv1_w"].shape[0]
    has_shortcut = (stride != 1) or (Cin != P)
    Cin_p = _round_up(Cin, LANE)
    P_p = _round_up(P, LANE)
    L_out = (L - 1) // stride + 1

    # bf16 slabs require pack-aligned (even-offset / even-length) stores & DMA; the strided
    # conv1 tap gather stays on an f32 slab (per-tap bf16 cast) to keep a proven lowering.
    pad1_dt = jnp.bfloat16 if (stride == 1 and L % 2 == 0) else jnp.float32
    pad2_dt = jnp.bfloat16 if (L_out % 2 == 0) else jnp.float32

    kernel, _ = _make_block_kernel(N, L, Cin_p, P_p, stride, has_shortcut, pad1_dt, pad2_dt)

    # ---- layout glue: channels-last, channels padded to lane width, per-tap weights ----
    x_nlc = jnp.transpose(x_ncl, (0, 2, 1))
    x_nlc = jnp.pad(x_nlc, ((0, 0), (0, 0), (0, Cin_p - Cin))).astype(pad1_dt)

    def fold_w(w, cin_p):                          # (Cout, cin, 3) -> (3, cin_p, P_p) bf16
        cout, cin, _ = w.shape
        wt = jnp.transpose(w, (2, 1, 0)).astype(jnp.float32)        # (3, cin, Cout)
        wt = jnp.pad(wt, ((0, 0), (0, cin_p - cin), (0, P_p - cout)))
        return wt.astype(jnp.bfloat16)

    def bn_par(g, b):
        gp = jnp.pad(g.astype(jnp.float32), (0, P_p - g.shape[0]), constant_values=1.0)
        bp = jnp.pad(b.astype(jnp.float32), (0, P_p - b.shape[0]))
        return gp.reshape(1, P_p), bp.reshape(1, P_p)

    g1, b1 = bn_par(params["bn1_g"], params["bn1_b"])
    g2, b2 = bn_par(params["bn2_g"], params["bn2_b"])
    args = [x_nlc, fold_w(params["conv1_w"], Cin_p), g1, b1,
            fold_w(params["conv2_w"], P_p), g2, b2]
    if has_shortcut:
        wsc = jnp.transpose(params["sc_w"][:, :, 0], (1, 0)).astype(jnp.float32)   # (Cin, P)
        wsc = jnp.pad(wsc, ((0, Cin_p - Cin), (0, P_p - P))).astype(jnp.bfloat16)
        gsc, bsc = bn_par(params["sc_g"], params["sc_b"])
        args += [wsc, gsc, bsc]

    in_specs = ([pl.BlockSpec(memory_space=pl.ANY)]                        # x stays in HBM
                + [pl.BlockSpec(memory_space=pltpu.MemorySpace.VMEM)] * (len(args) - 1))

    out_nlc = pl.pallas_call(
        kernel,
        out_shape=jax.ShapeDtypeStruct((N, L_out, P_p), jnp.bfloat16),     # lane-dense bf16
        in_specs=in_specs,
        out_specs=pl.BlockSpec(memory_space=pltpu.MemorySpace.VMEM),
        scratch_shapes=[pltpu.VMEM((N, L + 4, Cin_p), pad1_dt),       # padded conv1 input
                        pltpu.VMEM((N, L_out + 4, P_p), pad2_dt)],    # padded conv2 input
        compiler_params=pltpu.CompilerParams(vmem_limit_bytes=_vmem_limit_bytes()),
    )(*args)

    # Test/demo glue only: a stack of blocks would keep the padded channels-last bf16 layout
    # and skip this transpose / channel slice entirely.
    return jnp.transpose(out_nlc[:, :, :P].astype(jnp.float32), (0, 2, 1))   # (N, P, L_out)


# ---------------- pure-JAX reference (mirrors the PyTorch forward, NCL layout) ----------------
def _ref_conv1d(x, w, stride, pad):
    return lax.conv_general_dilated(x, w, (stride,), [(pad, pad)],
                                    dimension_numbers=("NCH", "OIH", "NCH"))


def _ref_bn(y, g, b):
    mean = jnp.mean(y, axis=(0, 2), keepdims=True)
    var = jnp.mean((y - mean) ** 2, axis=(0, 2), keepdims=True)
    return (y - mean) / jnp.sqrt(var + EPS) * g.reshape(1, -1, 1) + b.reshape(1, -1, 1)


def basic_block_1d_reference(x, params, stride):
    Cin = x.shape[1]
    P = params["conv1_w"].shape[0]
    out = jax.nn.relu(_ref_bn(_ref_conv1d(x, params["conv1_w"], stride, 1),
                              params["bn1_g"], params["bn1_b"]))
    out = _ref_bn(_ref_conv1d(out, params["conv2_w"], 1, 1),
                  params["bn2_g"], params["bn2_b"])
    if stride != 1 or Cin != P:
        sc = _ref_bn(_ref_conv1d(x, params["sc_w"], stride, 0),
                     params["sc_g"], params["sc_b"])
    else:
        sc = x
    return jax.nn.relu(out + sc)


if __name__ == "__main__":
    key = jax.random.PRNGKey(0)

    def run_case(N, Cin, P, L, stride, case_key):
        ks = jax.random.split(case_key, 9)
        params = {
            "conv1_w": 0.3 * jax.random.normal(ks[0], (P, Cin, 3), jnp.float32),
            "conv2_w": 0.3 * jax.random.normal(ks[1], (P, P, 3), jnp.float32),
            "bn1_g":   jax.random.uniform(ks[3], (P,), jnp.float32, 0.5, 1.5),
            "bn1_b":   0.1 * jax.random.normal(ks[4], (P,), jnp.float32),
            "bn2_g":   jax.random.uniform(ks[5], (P,), jnp.float32, 0.5, 1.5),
            "bn2_b":   0.1 * jax.random.normal(ks[6], (P,), jnp.float32),
        }
        if stride != 1 or Cin != P:
            params["sc_w"] = 0.3 * jax.random.normal(ks[2], (P, Cin, 1), jnp.float32)
            params["sc_g"] = jax.random.uniform(ks[7], (P,), jnp.float32, 0.5, 1.5)
            params["sc_b"] = 0.1 * jax.random.normal(ks[8], (P,), jnp.float32)
        x = jax.random.normal(jax.random.fold_in(case_key, 123), (N, Cin, L), jnp.float32)

        out = jax.block_until_ready(basic_block_1d(x, params, stride))
        ref = jax.block_until_ready(basic_block_1d_reference(x, params, stride))
        assert out.shape == (N, P, (L - 1) // stride + 1), out.shape
        # bf16 MXU operands / bf16 slabs / bf16 output (f32 accumulation & BN math) ->
        # compare against the f32 reference loosely.
        np.testing.assert_allclose(np.asarray(out), np.asarray(ref), atol=3e-2, rtol=3e-2)

    # projection shortcut active (stride != 1 and Cin != P)
    run_case(N=2, Cin=4, P=8, L=16, stride=2, case_key=jax.random.fold_in(key, 0))
    # identity shortcut (stride == 1, Cin == P)
    run_case(N=2, Cin=8, P=8, L=16, stride=1, case_key=jax.random.fold_in(key, 1))
    print("KERNEL_OK")
</pallas_src>

<mosaic_0001>
module attributes {stable_mosaic.version = 11 : i64} {
  func.func @kernel(%arg0: memref<2x16x128xf32, #tpu.memory_space<any>>, %arg1: memref<3x128x128xbf16, #tpu.memory_space<vmem>>, %arg2: memref<1x128xf32, #tpu.memory_space<vmem>>, %arg3: memref<1x128xf32, #tpu.memory_space<vmem>>, %arg4: memref<3x128x128xbf16, #tpu.memory_space<vmem>>, %arg5: memref<1x128xf32, #tpu.memory_space<vmem>>, %arg6: memref<1x128xf32, #tpu.memory_space<vmem>>, %arg7: memref<128x128xbf16, #tpu.memory_space<vmem>>, %arg8: memref<1x128xf32, #tpu.memory_space<vmem>>, %arg9: memref<1x128xf32, #tpu.memory_space<vmem>>, %arg10: memref<2x8x128xbf16, #tpu.memory_space<vmem>>, %arg11: memref<2x20x128xf32, #tpu.memory_space<vmem>>, %arg12: memref<2x12x128xbf16, #tpu.memory_space<vmem>>) attributes {dimension_semantics = [], scalar_prefetch = 0 : i64, scratch_operands = 2 : i64, tpu.core_type = #tpu.core_type<tc>} {
    %cst = arith.constant 0.000000e+00 : f32
    %0 = vector.broadcast %cst : f32 to vector<2x2x128xf32>
    %c0 = arith.constant 0 : index
    %c0_0 = arith.constant 0 : index
    %c0_1 = arith.constant 0 : index
    %1 = vector.load %arg11[%c0, %c0_0, %c0_1] : memref<2x20x128xf32, #tpu.memory_space<vmem>>, vector<2x2x128xf32>
    tpu.vector_store %arg11[%c0, %c0_0, %c0_1], %0 {strides = array<i32>} : memref<2x20x128xf32, #tpu.memory_space<vmem>>, vector<2x2x128xf32>,
    %c0_2 = arith.constant 0 : index
    %c18 = arith.constant 18 : index
    %c0_3 = arith.constant 0 : index
    %2 = vector.load %arg11[%c0_2, %c18, %c0_3] : memref<2x20x128xf32, #tpu.memory_space<vmem>>, vector<2x2x128xf32>
    tpu.vector_store %arg11[%c0_2, %c18, %c0_3], %0 {strides = array<i32>} : memref<2x20x128xf32, #tpu.memory_space<vmem>>, vector<2x2x128xf32>,
    "tpu.region"() ({
      %131 = tpu.sem_alloc : memref<!tpu.dma_semaphore, #tpu.memory_space<semaphore_mem>>
      %c0_i32 = arith.constant 0 : i32
      %c2_i32 = arith.constant 2 : i32
      %c0_i32_90 = arith.constant 0 : i32
      %132 = tpu.memref_slice %arg11[%c0_i32, %c2_i32, %c0_i32_90] : memref<2x20x128xf32, #tpu.memory_space<vmem>> -> memref<2x16x128xf32, #tpu.memory_space<vmem>>
      tpu.enqueue_dma source(%arg0 : memref<2x16x128xf32, #tpu.memory_space<any>>) target(%132 : memref<2x16x128xf32, #tpu.memory_space<vmem>>) target_semaphore(%131 : memref<!tpu.dma_semaphore, #tpu.memory_space<semaphore_mem>>)
      %c0_i32_91 = arith.constant 0 : i32
      %c2_i32_92 = arith.constant 2 : i32
      %c0_i32_93 = arith.constant 0 : i32
      %133 = tpu.memref_slice %arg11[%c0_i32_91, %c2_i32_92, %c0_i32_93] : memref<2x20x128xf32, #tpu.memory_space<vmem>> -> memref<2x16x128xf32, #tpu.memory_space<vmem>>
      tpu.wait_dma2 semaphore(%131 : memref<!tpu.dma_semaphore, #tpu.memory_space<semaphore_mem>>) src(%arg0 : memref<2x16x128xf32, #tpu.memory_space<any>>) dst(%133 : memref<2x16x128xf32, #tpu.memory_space<vmem>>)
      tpu.yield
    }) : () -> ()
    %c0_4 = arith.constant 0 : index
    %c1 = arith.constant 1 : index
    %c0_5 = arith.constant 0 : index
    %3 = tpu.strided_load %arg11[%c0_4, %c1, %c0_5] {strides = array<i32: 1, 2, 1>} : memref<2x20x128xf32, #tpu.memory_space<vmem>>, vector<2x8x128xf32>
    %4 = vector.shape_cast %3 : vector<2x8x128xf32> to vector<16x128xf32>
    %5 = arith.truncf %4 : vector<16x128xf32> to vector<16x128xbf16>
    %c0_6 = arith.constant 0 : index
    %c2 = arith.constant 2 : index
    %c0_7 = arith.constant 0 : index
    %6 = tpu.strided_load %arg11[%c0_6, %c2, %c0_7] {strides = array<i32: 1, 2, 1>} : memref<2x20x128xf32, #tpu.memory_space<vmem>>, vector<2x8x128xf32>
    %7 = vector.shape_cast %6 : vector<2x8x128xf32> to vector<16x128xf32>
    %8 = arith.truncf %7 : vector<16x128xf32> to vector<16x128xbf16>
    %c0_8 = arith.constant 0 : index
    %c3 = arith.constant 3 : index
    %c0_9 = arith.constant 0 : index
    %9 = tpu.strided_load %arg11[%c0_8, %c3, %c0_9] {strides = array<i32: 1, 2, 1>} : memref<2x20x128xf32, #tpu.memory_space<vmem>>, vector<2x8x128xf32>
    %10 = vector.shape_cast %9 : vector<2x8x128xf32> to vector<16x128xf32>
    %11 = arith.truncf %10 : vector<16x128xf32> to vector<16x128xbf16>
    %c0_10 = arith.constant 0 : index
    %c0_11 = arith.constant 0 : index
    %c0_12 = arith.constant 0 : index
    %12 = vector.load %arg1[%c0_10, %c0_11, %c0_12] : memref<3x128x128xbf16, #tpu.memory_space<vmem>>, vector<1x128x128xbf16>
    %13 = vector.shape_cast %12 : vector<1x128x128xbf16> to vector<128x128xbf16>
    %cst_13 = arith.constant dense<0.000000e+00> : vector<16x128xf32>
    %14 = tpu.matmul %5, %13, %cst_13 {dimension_numbers = #tpu.dot_dimension_numbers<[1], [0], [0], [1], [0, 0, 1, 1], [], []>} : vector<16x128xbf16>, vector<128x128xbf16>, vector<16x128xf32> -> vector<16x128xf32>
    %c1_14 = arith.constant 1 : index
    %c0_15 = arith.constant 0 : index
    %c0_16 = arith.constant 0 : index
    %15 = vector.load %arg1[%c1_14, %c0_15, %c0_16] : memref<3x128x128xbf16, #tpu.memory_space<vmem>>, vector<1x128x128xbf16>
    %16 = vector.shape_cast %15 : vector<1x128x128xbf16> to vector<128x128xbf16>
    %cst_17 = arith.constant dense<0.000000e+00> : vector<16x128xf32>
    %17 = tpu.matmul %8, %16, %cst_17 {dimension_numbers = #tpu.dot_dimension_numbers<[1], [0], [0], [1], [0, 0, 1, 1], [], []>} : vector<16x128xbf16>, vector<128x128xbf16>, vector<16x128xf32> -> vector<16x128xf32>
    %18 = arith.addf %14, %17 : vector<16x128xf32>
    %c2_18 = arith.constant 2 : index
    %c0_19 = arith.constant 0 : index
    %c0_20 = arith.constant 0 : index
    %19 = vector.load %arg1[%c2_18, %c0_19, %c0_20] : memref<3x128x128xbf16, #tpu.memory_space<vmem>>, vector<1x128x128xbf16>
    %20 = vector.shape_cast %19 : vector<1x128x128xbf16> to vector<128x128xbf16>
    %cst_21 = arith.constant dense<0.000000e+00> : vector<16x128xf32>
    %21 = tpu.matmul %11, %20, %cst_21 {dimension_numbers = #tpu.dot_dimension_numbers<[1], [0], [0], [1], [0, 0, 1, 1], [], []>} : vector<16x128xbf16>, vector<128x128xbf16>, vector<16x128xf32> -> vector<16x128xf32>
    %22 = arith.addf %18, %21 : vector<16x128xf32>
    %cst_22 = arith.constant dense<0.000000e+00> : vector<128xf32>
    %23 = vector.multi_reduction <add>, %22, %cst_22 [0] : vector<16x128xf32> to vector<128xf32>
    %24 = vector.shape_cast %23 : vector<128xf32> to vector<1x128xf32>
    %25 = arith.mulf %22, %22 : vector<16x128xf32>
    %cst_23 = arith.constant dense<0.000000e+00> : vector<128xf32>
    %26 = vector.multi_reduction <add>, %25, %cst_23 [0] : vector<16x128xf32> to vector<128xf32>
    %27 = vector.shape_cast %26 : vector<128xf32> to vector<1x128xf32>
    %cst_24 = arith.constant 6.250000e-02 : f32
    %28 = vector.broadcast %cst_24 : f32 to vector<1x128xf32>
    %29 = arith.mulf %24, %28 : vector<1x128xf32>
    %cst_25 = arith.constant 6.250000e-02 : f32
    %30 = vector.broadcast %cst_25 : f32 to vector<1x128xf32>
    %31 = arith.mulf %27, %30 : vector<1x128xf32>
    %32 = arith.mulf %29, %29 : vector<1x128xf32>
    %33 = arith.subf %31, %32 : vector<1x128xf32>
    %cst_26 = arith.constant 0.000000e+00 : f32
    %34 = vector.broadcast %cst_26 : f32 to vector<1x128xf32>
    %35 = arith.maximumf %33, %34 : vector<1x128xf32>
    %c0_27 = arith.constant 0 : index
    %c0_28 = arith.constant 0 : index
    %36 = vector.load %arg2[%c0_27, %c0_28] : memref<1x128xf32, #tpu.memory_space<vmem>>, vector<1x128xf32>
    %cst_29 = arith.constant 9.99999974E-6 : f32
    %37 = vector.broadcast %cst_29 : f32 to vector<1x128xf32>
    %38 = arith.addf %35, %37 : vector<1x128xf32>
    %39 = math.rsqrt %38 : vector<1x128xf32>
    %40 = arith.mulf %36, %39 : vector<1x128xf32>
    %c0_30 = arith.constant 0 : index
    %c0_31 = arith.constant 0 : index
    %41 = vector.load %arg3[%c0_30, %c0_31] : memref<1x128xf32, #tpu.memory_space<vmem>>, vector<1x128xf32>
    %42 = arith.mulf %29, %40 : vector<1x128xf32>
    %43 = arith.subf %41, %42 : vector<1x128xf32>
    %44 = vector.broadcast %40 : vector<1x128xf32> to vector<16x128xf32>
    %45 = arith.mulf %22, %44 : vector<16x128xf32>
    %46 = vector.broadcast %43 : vector<1x128xf32> to vector<16x128xf32>
    %47 = arith.addf %45, %46 : vector<16x128xf32>
    %cst_32 = arith.constant 0.000000e+00 : f32
    %48 = vector.broadcast %cst_32 : f32 to vector<16x128xf32>
    %49 = arith.maximumf %47, %48 : vector<16x128xf32>
    %cst_33 = arith.constant 0.000000e+00 : bf16
    %50 = vector.broadcast %cst_33 : bf16 to vector<2x2x128xbf16>
    %c0_34 = arith.constant 0 : index
    %c0_35 = arith.constant 0 : index
    %c0_36 = arith.constant 0 : index
    %51 = vector.load %arg12[%c0_34, %c0_35, %c0_36] : memref<2x12x128xbf16, #tpu.memory_space<vmem>>, vector<2x2x128xbf16>
    tpu.vector_store %arg12[%c0_34, %c0_35, %c0_36], %50 {strides = array<i32>} : memref<2x12x128xbf16, #tpu.memory_space<vmem>>, vector<2x2x128xbf16>,
    %c0_37 = arith.constant 0 : index
    %c10 = arith.constant 10 : index
    %c0_38 = arith.constant 0 : index
    %52 = vector.load %arg12[%c0_37, %c10, %c0_38] : memref<2x12x128xbf16, #tpu.memory_space<vmem>>, vector<2x2x128xbf16>
    tpu.vector_store %arg12[%c0_37, %c10, %c0_38], %50 {strides = array<i32>} : memref<2x12x128xbf16, #tpu.memory_space<vmem>>, vector<2x2x128xbf16>,
    %53 = vector.shape_cast %49 : vector<16x128xf32> to vector<2x8x128xf32>
    %54 = arith.truncf %53 : vector<2x8x128xf32> to vector<2x8x128xbf16>
    %c0_39 = arith.constant 0 : index
    %c2_40 = arith.constant 2 : index
    %c0_41 = arith.constant 0 : index
    %55 = vector.load %arg12[%c0_39, %c2_40, %c0_41] : memref<2x12x128xbf16, #tpu.memory_space<vmem>>, vector<2x8x128xbf16>
    tpu.vector_store %arg12[%c0_39, %c2_40, %c0_41], %54 {strides = array<i32>} : memref<2x12x128xbf16, #tpu.memory_space<vmem>>, vector<2x8x128xbf16>,
    %c0_42 = arith.constant 0 : index
    %c1_43 = arith.constant 1 : index
    %c0_44 = arith.constant 0 : index
    %56 = vector.load %arg12[%c0_42, %c1_43, %c0_44] : memref<2x12x128xbf16, #tpu.memory_space<vmem>>, vector<2x8x128xbf16>
    %57 = vector.shape_cast %56 : vector<2x8x128xbf16> to vector<16x128xbf16>
    %c0_45 = arith.constant 0 : index
    %c2_46 = arith.constant 2 : index
    %c0_47 = arith.constant 0 : index
    %58 = vector.load %arg12[%c0_45, %c2_46, %c0_47] : memref<2x12x128xbf16, #tpu.memory_space<vmem>>, vector<2x8x128xbf16>
    %59 = vector.shape_cast %58 : vector<2x8x128xbf16> to vector<16x128xbf16>
    %c0_48 = arith.constant 0 : index
    %c3_49 = arith.constant 3 : index
    %c0_50 = arith.constant 0 : index
    %60 = vector.load %arg12[%c0_48, %c3_49, %c0_50] : memref<2x12x128xbf16, #tpu.memory_space<vmem>>, vector<2x8x128xbf16>
    %61 = vector.shape_cast %60 : vector<2x8x128xbf16> to vector<16x128xbf16>
    %c0_51 = arith.constant 0 : index
    %c0_52 = arith.constant 0 : index
    %c0_53 = arith.constant 0 : index
    %62 = vector.load %arg4[%c0_51, %c0_52, %c0_53] : memref<3x128x128xbf16, #tpu.memory_space<vmem>>, vector<1x128x128xbf16>
    %63 = vector.shape_cast %62 : vector<1x128x128xbf16> to vector<128x128xbf16>
    %cst_54 = arith.constant dense<0.000000e+00> : vector<16x128xf32>
    %64 = tpu.matmul %57, %63, %cst_54 {dimension_numbers = #tpu.dot_dimension_numbers<[1], [0], [0], [1], [0, 0, 1, 1], [], []>} : vector<16x128xbf16>, vector<128x128xbf16>, vector<16x128xf32> -> vector<16x128xf32>
    %c1_55 = arith.constant 1 : index
    %c0_56 = arith.constant 0 : index
    %c0_57 = arith.constant 0 : index
    %65 = vector.load %arg4[%c1_55, %c0_56, %c0_57] : memref<3x128x128xbf16, #tpu.memory_space<vmem>>, vector<1x128x128xbf16>
    %66 = vector.shape_cast %65 : vector<1x128x128xbf16> to vector<128x128xbf16>
    %cst_58 = arith.constant dense<0.000000e+00> : vector<16x128xf32>
    %67 = tpu.matmul %59, %66, %cst_58 {dimension_numbers = #tpu.dot_dimension_numbers<[1], [0], [0], [1], [0, 0, 1, 1], [], []>} : vector<16x128xbf16>, vector<128x128xbf16>, vector<16x128xf32> -> vector<16x128xf32>
    %68 = arith.addf %64, %67 : vector<16x128xf32>
    %c2_59 = arith.constant 2 : index
    %c0_60 = arith.constant 0 : index
    %c0_61 = arith.constant 0 : index
    %69 = vector.load %arg4[%c2_59, %c0_60, %c0_61] : memref<3x128x128xbf16, #tpu.memory_space<vmem>>, vector<1x128x128xbf16>
    %70 = vector.shape_cast %69 : vector<1x128x128xbf16> to vector<128x128xbf16>
    %cst_62 = arith.constant dense<0.000000e+00> : vector<16x128xf32>
    %71 = tpu.matmul %61, %70, %cst_62 {dimension_numbers = #tpu.dot_dimension_numbers<[1], [0], [0], [1], [0, 0, 1, 1], [], []>} : vector<16x128xbf16>, vector<128x128xbf16>, vector<16x128xf32> -> vector<16x128xf32>
    %72 = arith.addf %68, %71 : vector<16x128xf32>
    %cst_63 = arith.constant dense<0.000000e+00> : vector<128xf32>
    %73 = vector.multi_reduction <add>, %72, %cst_63 [0] : vector<16x128xf32> to vector<128xf32>
    %74 = vector.shape_cast %73 : vector<128xf32> to vector<1x128xf32>
    %75 = arith.mulf %72, %72 : vector<16x128xf32>
    %cst_64 = arith.constant dense<0.000000e+00> : vector<128xf32>
    %76 = vector.multi_reduction <add>, %75, %cst_64 [0] : vector<16x128xf32> to vector<128xf32>
    %77 = vector.shape_cast %76 : vector<128xf32> to vector<1x128xf32>
    %cst_65 = arith.constant 6.250000e-02 : f32
    %78 = vector.broadcast %cst_65 : f32 to vector<1x128xf32>
    %79 = arith.mulf %74, %78 : vector<1x128xf32>
    %cst_66 = arith.constant 6.250000e-02 : f32
    %80 = vector.broadcast %cst_66 : f32 to vector<1x128xf32>
    %81 = arith.mulf %77, %80 : vector<1x128xf32>
    %82 = arith.mulf %79, %79 : vector<1x128xf32>
    %83 = arith.subf %81, %82 : vector<1x128xf32>
    %cst_67 = arith.constant 0.000000e+00 : f32
    %84 = vector.broadcast %cst_67 : f32 to vector<1x128xf32>
    %85 = arith.maximumf %83, %84 : vector<1x128xf32>
    %c0_68 = arith.constant 0 : index
    %c0_69 = arith.constant 0 : index
    %86 = vector.load %arg5[%c0_68, %c0_69] : memref<1x128xf32, #tpu.memory_space<vmem>>, vector<1x128xf32>
    %cst_70 = arith.constant 9.99999974E-6 : f32
    %87 = vector.broadcast %cst_70 : f32 to vector<1x128xf32>
    %88 = arith.addf %85, %87 : vector<1x128xf32>
    %89 = math.rsqrt %88 : vector<1x128xf32>
    %90 = arith.mulf %86, %89 : vector<1x128xf32>
    %c0_71 = arith.constant 0 : index
    %c0_72 = arith.constant 0 : index
    %91 = vector.load %arg6[%c0_71, %c0_72] : memref<1x128xf32, #tpu.memory_space<vmem>>, vector<1x128xf32>
    %92 = arith.mulf %79, %90 : vector<1x128xf32>
    %93 = arith.subf %91, %92 : vector<1x128xf32>
    %94 = vector.broadcast %90 : vector<1x128xf32> to vector<16x128xf32>
    %95 = arith.mulf %72, %94 : vector<16x128xf32>
    %96 = vector.broadcast %93 : vector<1x128xf32> to vector<16x128xf32>
    %97 = arith.addf %95, %96 : vector<16x128xf32>
    %c0_73 = arith.constant 0 : index
    %c0_74 = arith.constant 0 : index
    %98 = vector.load %arg7[%c0_73, %c0_74] : memref<128x128xbf16, #tpu.memory_space<vmem>>, vector<128x128xbf16>
    %cst_75 = arith.constant dense<0.000000e+00> : vector<16x128xf32>
    %99 = tpu.matmul %8, %98, %cst_75 {dimension_numbers = #tpu.dot_dimension_numbers<[1], [0], [0], [1], [0, 0, 1, 1], [], []>} : vector<16x128xbf16>, vector<128x128xbf16>, vector<16x128xf32> -> vector<16x128xf32>
    %cst_76 = arith.constant dense<0.000000e+00> : vector<128xf32>
    %100 = vector.multi_reduction <add>, %99, %cst_76 [0] : vector<16x128xf32> to vector<128xf32>
    %101 = vector.shape_cast %100 : vector<128xf32> to vector<1x128xf32>
    %102 = arith.mulf %99, %99 : vector<16x128xf32>
    %cst_77 = arith.constant dense<0.000000e+00> : vector<128xf32>
    %103 = vector.multi_reduction <add>, %102, %cst_77 [0] : vector<16x128xf32> to vector<128xf32>
    %104 = vector.shape_cast %103 : vector<128xf32> to vector<1x128xf32>
    %cst_78 = arith.constant 6.250000e-02 : f32
    %105 = vector.broadcast %cst_78 : f32 to vector<1x128xf32>
    %106 = arith.mulf %101, %105 : vector<1x128xf32>
    %cst_79 = arith.constant 6.250000e-02 : f32
    %107 = vector.broadcast %cst_79 : f32 to vector<1x128xf32>
    %108 = arith.mulf %104, %107 : vector<1x128xf32>
    %109 = arith.mulf %106, %106 : vector<1x128xf32>
    %110 = arith.subf %108, %109 : vector<1x128xf32>
    %cst_80 = arith.constant 0.000000e+00 : f32
    %111 = vector.broadcast %cst_80 : f32 to vector<1x128xf32>
    %112 = arith.maximumf %110, %111 : vector<1x128xf32>
    %c0_81 = arith.constant 0 : index
    %c0_82 = arith.constant 0 : index
    %113 = vector.load %arg8[%c0_81, %c0_82] : memref<1x128xf32, #tpu.memory_space<vmem>>, vector<1x128xf32>
    %cst_83 = arith.constant 9.99999974E-6 : f32
    %114 = vector.broadcast %cst_83 : f32 to vector<1x128xf32>
    %115 = arith.addf %112, %114 : vector<1x128xf32>
    %116 = math.rsqrt %115 : vector<1x128xf32>
    %117 = arith.mulf %113, %116 : vector<1x128xf32>
    %c0_84 = arith.constant 0 : index
    %c0_85 = arith.constant 0 : index
    %118 = vector.load %arg9[%c0_84, %c0_85] : memref<1x128xf32, #tpu.memory_space<vmem>>, vector<1x128xf32>
    %119 = arith.mulf %106, %117 : vector<1x128xf32>
    %120 = arith.subf %118, %119 : vector<1x128xf32>
    %121 = vector.broadcast %117 : vector<1x128xf32> to vector<16x128xf32>
    %122 = arith.mulf %99, %121 : vector<16x128xf32>
    %123 = vector.broadcast %120 : vector<1x128xf32> to vector<16x128xf32>
    %124 = arith.addf %122, %123 : vector<16x128xf32>
    %125 = arith.addf %97, %124 : vector<16x128xf32>
    %cst_86 = arith.constant 0.000000e+00 : f32
    %126 = vector.broadcast %cst_86 : f32 to vector<16x128xf32>
    %127 = arith.maximumf %125, %126 : vector<16x128xf32>
    %128 = vector.shape_cast %127 : vector<16x128xf32> to vector<2x8x128xf32>
    %129 = arith.truncf %128 : vector<2x8x128xf32> to vector<2x8x128xbf16>
    %c0_87 = arith.constant 0 : index
    %c0_88 = arith.constant 0 : index
    %c0_89 = arith.constant 0 : index
    %130 = vector.load %arg10[%c0_87, %c0_88, %c0_89] : memref<2x8x128xbf16, #tpu.memory_space<vmem>>, vector<2x8x128xbf16>
    tpu.vector_store %arg10[%c0_87, %c0_88, %c0_89], %129 {strides = array<i32>} : memref<2x8x128xbf16, #tpu.memory_space<vmem>>, vector<2x8x128xbf16>,
    return
  }
}

</mosaic_0001>

<llo_original>
// kernel: tpu_custom_call.1
$region0: #{tpu_custom_call.1}
  #allocation0 [shape = 'u32[]', space=smem, size = 0x4, offset = 0x4, fixed_abs, tag = 'smem constant byte address 0x4 - core index']
  #allocation1 [shape = 'u32[144,128]{1,0:T(1,128)}', space=vmem, size = 0x12000, scoped, tag = 'internal scratch']
  #allocation2 [shape = 'f32[2,20,128]{2,1,0:T(8,128)}', space=vmem, size = 0x6000, scoped, tag = 'scratch operand']
  #allocation3 [shape = 'bf16[2,12,128]{2,1,0:T(8,128)(2,1)}', space=vmem, size = 0x2000, scoped, tag = 'scratch operand']
  #allocation12 [shape = 's32[]', space=sflag, size = 0x4, offset = 0, fixed_abs, tag = 'sflag constant byte address 0x0 - dummy sync flag']
  %s0 = inlined_call_operand.hbm [shape: f32[2,16,128], index: 0, kind: input, shape index: {}]
  %s1 = inlined_call_operand.hbm [shape: bf16[3,128,128], index: 1, kind: input, shape index: {}]
  %s2 = inlined_call_operand.vmem [shape: f32[1,128], index: 2, kind: input, shape index: {}]
  %s3 = inlined_call_operand.vmem [shape: f32[1,128], index: 3, kind: input, shape index: {}]
  %s4 = inlined_call_operand.hbm [shape: bf16[3,128,128], index: 4, kind: input, shape index: {}]
  %s5 = inlined_call_operand.vmem [shape: f32[1,128], index: 5, kind: input, shape index: {}]
  %s6 = inlined_call_operand.vmem [shape: f32[1,128], index: 6, kind: input, shape index: {}]
  %s7 = inlined_call_operand.hbm [shape: bf16[128,128], index: 7, kind: input, shape index: {}]
  %s8 = inlined_call_operand.vmem [shape: f32[1,128], index: 8, kind: input, shape index: {}]
  %s9 = inlined_call_operand.vmem [shape: f32[1,128], index: 9, kind: input, shape index: {}]
  %s10 = inlined_call_operand.hbm [shape: bf16[2,8,128], index: 10, kind: output, shape index: {}]
  %s11 = sld [smem:[#allocation0]]
  $region59: #{tpu_custom_call.1} parent=0
    _
  %s13 = ssub.s32 1, %s11
  %s14 = scalar_select 0, %s13, %s11
  $region1: #{tpu_custom_call.1} parent=0
    #allocation4 [shape = 'u8[98304]{0}', space=vmem, size = 0x18000, scoped, tag = 'input window, operand 1, single buffered']
    #allocation5 [shape = 's32[1]{0}', space=sflag, size = 0x4, scoped, tag = 'scoped memory for tpu_custom_call.1']
    #allocation6 [shape = 's32[1]{0}', space=sflag, size = 0x4, scoped, tag = 'scoped memory for tpu_custom_call.1']
    #allocation7 [shape = 'u8[98304]{0}', space=vmem, size = 0x18000, scoped, tag = 'input window, operand 4, single buffered']
    #allocation8 [shape = 's32[1]{0}', space=sflag, size = 0x4, scoped, tag = 'scoped memory for tpu_custom_call.1']
    #allocation9 [shape = 'u8[32768]{0}', space=vmem, size = 0x8000, scoped, tag = 'input window, operand 7, single buffered']
    #allocation10 [shape = 'u8[4096]{0}', space=vmem, size = 0x1000, scoped, tag = 'output window, operand 0, single buffered']
    %15 = vsyncpa [#allocation5], 0
    %16 = vsyncpa [#allocation8], 0
    %17 = vsyncpa [#allocation6], 0
    // Predicated region
    $region2: #{tpu_custom_call.1} parent=1 // pred_check
      _
    $region3: #{tpu_custom_call.1} parent=1 // pred_check_branch
      %19 = sbr.rel (0) target = $region5
    $region4: #{tpu_custom_call.1} parent=1 // pred_region
      %s21 = ssub.s32 3072, 3072
      %22 = vsyncadd [#allocation5], %s21
      %s23 = sshll.u32 [#allocation4], 4
      %s24 = int_to_ptr.vmem [resolvable:$true] %s23
      %29 = dma.hbm_to_vmem [thread:$0]  %s1, 3072, %s24, [#allocation5], 64, 64, 4
    $region5: #{tpu_custom_call.1} parent=1 // pred_fallthru
      _
    // Predicated region
    $region6: #{tpu_custom_call.1} parent=1 // pred_check
      _
    $region7: #{tpu_custom_call.1} parent=1 // pred_check_branch
      %31 = sbr.rel (0) target = $region9
    $region8: #{tpu_custom_call.1} parent=1 // pred_region
      _
    $region9: #{tpu_custom_call.1} parent=1 // pred_fallthru
      _
    // Predicated region
    $region10: #{tpu_custom_call.1} parent=1 // pred_check
      _
    $region11: #{tpu_custom_call.1} parent=1 // pred_check_branch
      %33 = sbr.rel (0) target = $region13
    $region12: #{tpu_custom_call.1} parent=1 // pred_region
      _
    $region13: #{tpu_custom_call.1} parent=1 // pred_fallthru
      _
    // Predicated region
    $region14: #{tpu_custom_call.1} parent=1 // pred_check
      _
    $region15: #{tpu_custom_call.1} parent=1 // pred_check_branch
      %35 = sbr.rel (0) target = $region17
    $region16: #{tpu_custom_call.1} parent=1 // pred_region
      %s37 = ssub.s32 3072, 3072
      %38 = vsyncadd [#allocation8], %s37
      %s39 = sshll.u32 [#allocation7], 4
      %s40 = int_to_ptr.vmem [resolvable:$true] %s39
      %45 = dma.hbm_to_vmem [thread:$0]  %s4, 3072, %s40, [#allocation8], 64, 64, 4
    $region17: #{tpu_custom_call.1} parent=1 // pred_fallthru
      _
    // Predicated region
    $region18: #{tpu_custom_call.1} parent=1 // pred_check
      _
    $region19: #{tpu_custom_call.1} parent=1 // pred_check_branch
      %47 = sbr.rel (0) target = $region21
    $region20: #{tpu_custom_call.1} parent=1 // pred_region
      _
    $region21: #{tpu_custom_call.1} parent=1 // pred_fallthru
      _
    // Predicated region
    $region22: #{tpu_custom_call.1} parent=1 // pred_check
      _
    $region23: #{tpu_custom_call.1} parent=1 // pred_check_branch
      %49 = sbr.rel (0) target = $region25
    $region24: #{tpu_custom_call.1} parent=1 // pred_region
      _
    $region25: #{tpu_custom_call.1} parent=1 // pred_fallthru
      _
    // Predicated region
    $region26: #{tpu_custom_call.1} parent=1 // pred_check
      _
    $region27: #{tpu_custom_call.1} parent=1 // pred_check_branch
      %51 = sbr.rel (0) target = $region29
    $region28: #{tpu_custom_call.1} parent=1 // pred_region
      %s53 = ssub.s32 1024, 1024
      %54 = vsyncadd [#allocation8], %s53
      %s55 = sshll.u32 [#allocation9], 4
      %s56 = int_to_ptr.vmem [resolvable:$true] %s55
      %61 = dma.hbm_to_vmem [thread:$0]  %s7, 1024, %s56, [#allocation8], 64, 64, 4
    $region29: #{tpu_custom_call.1} parent=1 // pred_fallthru
      _
    // Predicated region
    $region30: #{tpu_custom_call.1} parent=1 // pred_check
      _
    $region31: #{tpu_custom_call.1} parent=1 // pred_check_branch
      %63 = sbr.rel (0) target = $region33
    $region32: #{tpu_custom_call.1} parent=1 // pred_region
      _
    $region33: #{tpu_custom_call.1} parent=1 // pred_fallthru
      _
    // Predicated region
    $region34: #{tpu_custom_call.1} parent=1 // pred_check
      _
    $region35: #{tpu_custom_call.1} parent=1 // pred_check_branch
      %65 = sbr.rel (0) target = $region37
    $region36: #{tpu_custom_call.1} parent=1 // pred_region
      _
    $region37: #{tpu_custom_call.1} parent=1 // pred_fallthru
      _
    // Predicated region
    $region38: #{tpu_custom_call.1} parent=1 // pred_check
      _
    $region39: #{tpu_custom_call.1} parent=1 // pred_check_branch
      %67 = sbr.rel (0) target = $region41
    $region40: #{tpu_custom_call.1} parent=1 // pred_region
      %68 = dma.done [#allocation5], 3072
    $region41: #{tpu_custom_call.1} parent=1 // pred_fallthru
      _
    // Predicated region
    $region42: #{tpu_custom_call.1} parent=1 // pred_check
      _
    $region43: #{tpu_custom_call.1} parent=1 // pred_check_branch
      %70 = sbr.rel (0) target = $region45
    $region44: #{tpu_custom_call.1} parent=1 // pred_region
      %71 = dma.done [#allocation8], 3072
    $region45: #{tpu_custom_call.1} parent=1 // pred_fallthru
      _
    // Predicated region
    $region46: #{tpu_custom_call.1} parent=1 // pred_check
      _
    $region47: #{tpu_custom_call.1} parent=1 // pred_check_branch
      %73 = sbr.rel (0) target = $region49
    $region48: #{tpu_custom_call.1} parent=1 // pred_region
      %74 = dma.done [#allocation8], 1024
    $region49: #{tpu_custom_call.1} parent=1 // pred_fallthru
      _
    %76 = vst [vmem:[#allocation2] sm:$0x3] 0.0
    %77 = vst [vmem:[#allocation2 + $0x18] sm:$0x3] 0.0
    %78 = vst [vmem:[#allocation2 + $0x12] sm:$0x3] 0.0
    %79 = vst [vmem:[#allocation2 + $0x2a] sm:$0x3] 0.0
    $region50: #{tpu_custom_call.1} parent=1
      #allocation11 [shape = 's32[1]{0}', space=sflag, size = 0x4, scoped, tag = 'scoped memory for tpu_custom_call.1']
      %s80 = scalar_lea.vmem [#allocation2], 2
      %s82 = sshll.u32 %s80, 4
      %s83 = int_to_ptr.vmem [resolvable:$true] %s82
      %85 = dma.hbm_to_vmem [thread:$0]  %s0, 512, %s83, [#allocation11], 256, 384, 16
      %s86 = smul.u32 2, 16
      %s87 = smul.u32 %s86, 1
      %s88 = sshll.u32 %s87, 4
      %89 = dma.done [#allocation11], %s88
    %s90 = scalar_lea.vmem [#allocation2], 1
    %v91 = vld [vmem:[%s90] ss:$2 sm:$0xff]
    %s92 = scalar_lea.vmem [#allocation2], 25
    %v93 = vld [vmem:[%s92] ss:$2 sm:$0xff]
    %v94 = vpack.c.bf16 %v93, %v91
    %s95 = scalar_lea.vmem [#allocation2], 2
    %v96 = vld [vmem:[%s95] ss:$2 sm:$0xff]
    %s97 = scalar_lea.vmem [#allocation2], 26
    %v98 = vld [vmem:[%s97] ss:$2 sm:$0xff]
    %v99 = vpack.c.bf16 %v98, %v96
    %s100 = scalar_lea.vmem [#allocation2], 3
    %v101 = vld [vmem:[%s100] ss:$2 sm:$0xff]
    %s102 = scalar_lea.vmem [#allocation2], 27
    %v103 = vld [vmem:[%s102] ss:$2 sm:$0xff]
    %v104 = vpack.c.bf16 %v103, %v101
    %v105 = vld [vmem:[#allocation4] sm:$0xf]
    %v106 = vld [vmem:[#allocation4 + $0x4] sm:$0xf]
    %v107 = vld [vmem:[#allocation4 + $0x8] sm:$0xf]
    %v108 = vld [vmem:[#allocation4 + $0xc] sm:$0xf]
    %v109 = vld [vmem:[#allocation4 + $0x10] sm:$0xf]
    %v110 = vld [vmem:[#allocation4 + $0x14] sm:$0xf]
    %v111 = vld [vmem:[#allocation4 + $0x18] sm:$0xf]
    %v112 = vld [vmem:[#allocation4 + $0x1c] sm:$0xf]
    %v113 = vld [vmem:[#allocation4 + $0x20] sm:$0xf]
    %v114 = vld [vmem:[#allocation4 + $0x24] sm:$0xf]
    %v115 = vld [vmem:[#allocation4 + $0x28] sm:$0xf]
    %v116 = vld [vmem:[#allocation4 + $0x2c] sm:$0xf]
    %v117 = vld [vmem:[#allocation4 + $0x30] sm:$0xf]
    %v118 = vld [vmem:[#allocation4 + $0x34] sm:$0xf]
    %v119 = vld [vmem:[#allocation4 + $0x38] sm:$0xf]
    %v120 = vld [vmem:[#allocation4 + $0x3c] sm:$0xf]
    %s121 = scalar_lea.vmem [#allocation4], 64
    %v122 = vld [vmem:[%s121] sm:$0xf]
    %v123 = vld [vmem:[%s121 + $0x4] sm:$0xf]
    %v124 = vld [vmem:[%s121 + $0x8] sm:$0xf]
    %v125 = vld [vmem:[%s121 + $0xc] sm:$0xf]
    %v126 = vld [vmem:[%s121 + $0x10] sm:$0xf]
    %v127 = vld [vmem:[%s121 + $0x14] sm:$0xf]
    %v128 = vld [vmem:[%s121 + $0x18] sm:$0xf]
    %v129 = vld [vmem:[%s121 + $0x1c] sm:$0xf]
    %v130 = vld [vmem:[%s121 + $0x20] sm:$0xf]
    %v131 = vld [vmem:[%s121 + $0x24] sm:$0xf]
    %v132 = vld [vmem:[%s121 + $0x28] sm:$0xf]
    %v133 = vld [vmem:[%s121 + $0x2c] sm:$0xf]
    %v134 = vld [vmem:[%s121 + $0x30] sm:$0xf]
    %v135 = vld [vmem:[%s121 + $0x34] sm:$0xf]
    %v136 = vld [vmem:[%s121 + $0x38] sm:$0xf]
    %v137 = vld [vmem:[%s121 + $0x3c] sm:$0xf]
    %v154 = vunpack.c.l.b16 %v122
    %v155 = vunpack.c.l.b16 %v123
    %v156 = vunpack.c.l.b16 %v124
    %v157 = vunpack.c.l.b16 %v125
    %v158 = vunpack.c.l.b16 %v126
    %v159 = vunpack.c.l.b16 %v127
    %v160 = vunpack.c.l.b16 %v128
    %v161 = vunpack.c.l.b16 %v129
    %v162 = vunpack.c.l.b16 %v130
    %v163 = vunpack.c.l.b16 %v131
    %v164 = vunpack.c.l.b16 %v132
    %v165 = vunpack.c.l.b16 %v133
    %v166 = vunpack.c.l.b16 %v134
    %v167 = vunpack.c.l.b16 %v135
    %v168 = vunpack.c.l.b16 %v136
    %v169 = vunpack.c.l.b16 %v137
    %v170 = vpack.c.b16 %v155, %v154
    %v171 = vpack.c.b16 %v157, %v156
    %v172 = vpack.c.b16 %v159, %v158
    %v173 = vpack.c.b16 %v161, %v160
    %v174 = vpack.c.b16 %v163, %v162
    %v175 = vpack.c.b16 %v165, %v164
    %v176 = vpack.c.b16 %v167, %v166
    %v177 = vpack.c.b16 %v169, %v168
    %186 = vmatprep.subr.bf16.mxu0 0
    %187 = vmatpush1.bf16.msra.mxu0 %v170
    %188 = vmatprep.subr.bf16.mxu0 0
    %189 = vmatpush1.bf16.msra.mxu0 %v171
    %190 = vmatprep.subr.bf16.mxu0 0
    %191 = vmatpush1.bf16.msra.mxu0 %v172
    %192 = vmatprep.subr.bf16.mxu0 0
    %193 = vmatpush1.bf16.msra.mxu0 %v173
    %194 = vmatprep.subr.bf16.mxu0 0
    %195 = vmatpush1.bf16.msra.mxu0 %v174
    %196 = vmatprep.subr.bf16.mxu0 0
    %197 = vmatpush1.bf16.msra.mxu0 %v175
    %198 = vmatprep.subr.bf16.mxu0 0
    %199 = vmatpush1.bf16.msra.mxu0 %v176
    %200 = vmatprep.subr.bf16.mxu0 0
    %201 = vmatpush1.bf16.msra.mxu0 %v177
    %202 = vmatprep.subr.bf16.mxu0 0
    %203 = vmatpush1.bf16.msra.mxu0 0
    %204 = vmatprep.subr.bf16.mxu0 0
    %205 = vmatpush1.bf16.msra.mxu0 0
    %206 = vmatprep.subr.bf16.mxu0 0
    %207 = vmatpush1.bf16.msra.mxu0 0
    %208 = vmatprep.subr.bf16.mxu0 0
    %209 = vmatpush1.bf16.msra.mxu0 0
    %210 = vmatprep.subr.bf16.mxu0 0
    %211 = vmatpush1.bf16.msra.mxu0 0
    %212 = vmatprep.subr.bf16.mxu0 0
    %213 = vmatpush1.bf16.msra.mxu0 0
    %214 = vmatprep.subr.bf16.mxu0 0
    %215 = vmatpush1.bf16.msra.mxu0 0
    %216 = vmatprep.subr.bf16.mxu0 0
    %217 = vmatpush1.bf16.msra.mxu0 0
    %218 = vmatprep.mubr.bf16.mxu0 0
    %219 = vmatmul.mubr.bf16.gmra.mrb[0].mxu0 %v99
    %v220 = vpop.f32.mrb[0].mxu0
    %v221 = vadd.f32 0.0, %v220
    %v222 = vpop.f32.mrb[0].mxu0
    %v223 = vpop.f32.mrb[0].mxu0
    %v224 = vadd.f32 0.0, %v223
    %v225 = vpop.f32.mrb[0].mxu0
    %226 = vdwg.mxu0
    %v243 = vunpack.c.l.b16 %v105
    %v244 = vunpack.c.l.b16 %v106
    %v245 = vunpack.c.l.b16 %v107
    %v246 = vunpack.c.l.b16 %v108
    %v247 = vunpack.c.l.b16 %v109
    %v248 = vunpack.c.l.b16 %v110
    %v249 = vunpack.c.l.b16 %v111
    %v250 = vunpack.c.l.b16 %v112
    %v251 = vunpack.c.l.b16 %v113
    %v252 = vunpack.c.l.b16 %v114
    %v253 = vunpack.c.l.b16 %v115
    %v254 = vunpack.c.l.b16 %v116
    %v255 = vunpack.c.l.b16 %v117
    %v256 = vunpack.c.l.b16 %v118
    %v257 = vunpack.c.l.b16 %v119
    %v258 = vunpack.c.l.b16 %v120
    %v259 = vpack.c.b16 %v244, %v243
    %v260 = vpack.c.b16 %v246, %v245
    %v261 = vpack.c.b16 %v248, %v247
    %v262 = vpack.c.b16 %v250, %v249
    %v263 = vpack.c.b16 %v252, %v251
    %v264 = vpack.c.b16 %v254, %v253
    %v265 = vpack.c.b16 %v256, %v255
    %v266 = vpack.c.b16 %v258, %v257
    %275 = vmatprep.subr.bf16.mxu0 0
    %276 = vmatpush1.bf16.msra.mxu0 %v259
    %277 = vmatprep.subr.bf16.mxu0 0
    %278 = vmatpush1.bf16.msra.mxu0 %v260
    %279 = vmatprep.subr.bf16.mxu0 0
    %280 = vmatpush1.bf16.msra.mxu0 %v261
    %281 = vmatprep.subr.bf16.mxu0 0
    %282 = vmatpush1.bf16.msra.mxu0 %v262
    %283 = vmatprep.subr.bf16.mxu0 0
    %284 = vmatpush1.bf16.msra.mxu0 %v263
    %285 = vmatprep.subr.bf16.mxu0 0
    %286 = vmatpush1.bf16.msra.mxu0 %v264
    %287 = vmatprep.subr.bf16.mxu0 0
    %288 = vmatpush1.bf16.msra.mxu0 %v265
    %289 = vmatprep.subr.bf16.mxu0 0
    %290 = vmatpush1.bf16.msra.mxu0 %v266
    %291 = vmatprep.subr.bf16.mxu0 0
    %292 = vmatpush1.bf16.msra.mxu0 0
    %293 = vmatprep.subr.bf16.mxu0 0
    %294 = vmatpush1.bf16.msra.mxu0 0
    %295 = vmatprep.subr.bf16.mxu0 0
    %296 = vmatpush1.bf16.msra.mxu0 0
    %297 = vmatprep.subr.bf16.mxu0 0
    %298 = vmatpush1.bf16.msra.mxu0 0
    %299 = vmatprep.subr.bf16.mxu0 0
    %300 = vmatpush1.bf16.msra.mxu0 0
    %301 = vmatprep.subr.bf16.mxu0 0
    %302 = vmatpush1.bf16.msra.mxu0 0
    %303 = vmatprep.subr.bf16.mxu0 0
    %304 = vmatpush1.bf16.msra.mxu0 0
    %305 = vmatprep.subr.bf16.mxu0 0
    %306 = vmatpush1.bf16.msra.mxu0 0
    %307 = vmatprep.mubr.bf16.mxu0 0
    %308 = vmatmul.mubr.bf16.gmra.mrb[0].mxu0 %v94
    %v309 = vpop.f32.mrb[0].mxu0
    %v310 = vadd.f32 %v221, %v309
    %v311 = vpop.f32.mrb[0].mxu0
    %v312 = vpop.f32.mrb[0].mxu0
    %v313 = vadd.f32 %v224, %v312
    %v314 = vpop.f32.mrb[0].mxu0
    %315 = vdwg.mxu0
    %s316 = scalar_lea.vmem [#allocation4], 128
    %v317 = vld [vmem:[%s316] sm:$0xf]
    %v318 = vld [vmem:[%s316 + $0x4] sm:$0xf]
    %v319 = vld [vmem:[%s316 + $0x8] sm:$0xf]
    %v320 = vld [vmem:[%s316 + $0xc] sm:$0xf]
    %v321 = vld [vmem:[%s316 + $0x10] sm:$0xf]
    %v322 = vld [vmem:[%s316 + $0x14] sm:$0xf]
    %v323 = vld [vmem:[%s316 + $0x18] sm:$0xf]
    %v324 = vld [vmem:[%s316 + $0x1c] sm:$0xf]
    %v325 = vld [vmem:[%s316 + $0x20] sm:$0xf]
    %v326 = vld [vmem:[%s316 + $0x24] sm:$0xf]
    %v327 = vld [vmem:[%s316 + $0x28] sm:$0xf]
    %v328 = vld [vmem:[%s316 + $0x2c] sm:$0xf]
    %v329 = vld [vmem:[%s316 + $0x30] sm:$0xf]
    %v330 = vld [vmem:[%s316 + $0x34] sm:$0xf]
    %v331 = vld [vmem:[%s316 + $0x38] sm:$0xf]
    %v332 = vld [vmem:[%s316 + $0x3c] sm:$0xf]
    %v349 = vunpack.c.l.b16 %v317
    %v350 = vunpack.c.l.b16 %v318
    %v351 = vunpack.c.l.b16 %v319
    %v352 = vunpack.c.l.b16 %v320
    %v353 = vunpack.c.l.b16 %v321
    %v354 = vunpack.c.l.b16 %v322
    %v355 = vunpack.c.l.b16 %v323
    %v356 = vunpack.c.l.b16 %v324
    %v357 = vunpack.c.l.b16 %v325
    %v358 = vunpack.c.l.b16 %v326
    %v359 = vunpack.c.l.b16 %v327
    %v360 = vunpack.c.l.b16 %v328
    %v361 = vunpack.c.l.b16 %v329
    %v362 = vunpack.c.l.b16 %v330
    %v363 = vunpack.c.l.b16 %v331
    %v364 = vunpack.c.l.b16 %v332
    %v365 = vpack.c.b16 %v350, %v349
    %v366 = vpack.c.b16 %v352, %v351
    %v367 = vpack.c.b16 %v354, %v353
    %v368 = vpack.c.b16 %v356, %v355
    %v369 = vpack.c.b16 %v358, %v357
    %v370 = vpack.c.b16 %v360, %v359
    %v371 = vpack.c.b16 %v362, %v361
    %v372 = vpack.c.b16 %v364, %v363
    %381 = vmatprep.subr.bf16.mxu0 0
    %382 = vmatpush1.bf16.msra.mxu0 %v365
    %383 = vmatprep.subr.bf16.mxu0 0
    %384 = vmatpush1.bf16.msra.mxu0 %v366
    %385 = vmatprep.subr.bf16.mxu0 0
    %386 = vmatpush1.bf16.msra.mxu0 %v367
    %387 = vmatprep.subr.bf16.mxu0 0
    %388 = vmatpush1.bf16.msra.mxu0 %v368
    %389 = vmatprep.subr.bf16.mxu0 0
    %390 = vmatpush1.bf16.msra.mxu0 %v369
    %391 = vmatprep.subr.bf16.mxu0 0
    %392 = vmatpush1.bf16.msra.mxu0 %v370
    %393 = vmatprep.subr.bf16.mxu0 0
    %394 = vmatpush1.bf16.msra.mxu0 %v371
    %395 = vmatprep.subr.bf16.mxu0 0
    %396 = vmatpush1.bf16.msra.mxu0 %v372
    %397 = vmatprep.subr.bf16.mxu0 0
    %398 = vmatpush1.bf16.msra.mxu0 0
    %399 = vmatprep.subr.bf16.mxu0 0
    %400 = vmatpush1.bf16.msra.mxu0 0
    %401 = vmatprep.subr.bf16.mxu0 0
    %402 = vmatpush1.bf16.msra.mxu0 0
    %403 = vmatprep.subr.bf16.mxu0 0
    %404 = vmatpush1.bf16.msra.mxu0 0
    %405 = vmatprep.subr.bf16.mxu0 0
    %406 = vmatpush1.bf16.msra.mxu0 0
    %407 = vmatprep.subr.bf16.mxu0 0
    %408 = vmatpush1.bf16.msra.mxu0 0
    %409 = vmatprep.subr.bf16.mxu0 0
    %410 = vmatpush1.bf16.msra.mxu0 0
    %411 = vmatprep.subr.bf16.mxu0 0
    %412 = vmatpush1.bf16.msra.mxu0 0
    %413 = vmatprep.mubr.bf16.mxu0 0
    %414 = vmatmul.mubr.bf16.gmra.mrb[0].mxu0 %v104
    %v415 = vpop.f32.mrb[0].mxu0
    %v416 = vadd.f32 0.0, %v415
    %v417 = vpop.f32.mrb[0].mxu0
    %v418 = vpop.f32.mrb[0].mxu0
    %v419 = vadd.f32 0.0, %v418
    %v420 = vpop.f32.mrb[0].mxu0
    %421 = vdwg.mxu0
    %v422 = vadd.f32 %v310, %v416
    %v423 = vadd.f32 %v313, %v419
    %v424 = vadd.f32 %v422, %v423
    %v425 = vrot.slane %v424, 4
    %v426 = vadd.f32 %v424, %v425
    %v427 = vrot.slane %v426, 2
    %v428 = vadd.f32 %v426, %v427
    %v429 = vrot.slane %v428, 1
    %v430 = vadd.f32 %v428, %v429
    %v431 = vmul.f32 %v422, %v422
    %v432 = vmul.f32 %v423, %v423
    %v433 = vadd.f32 %v431, %v432
    %v434 = vrot.slane %v433, 4
    %v435 = vadd.f32 %v433, %v434
    %v436 = vrot.slane %v435, 2
    %v437 = vadd.f32 %v435, %v436
    %v438 = vrot.slane %v437, 1
    %v439 = vadd.f32 %v437, %v438
    %v440 = vmul.f32 %v430, 0.0625
    %v441 = vmul.f32 %v439, 0.0625
    %v442 = vmul.f32 %v440, %v440
    %v443 = vsub.f32 %v441, %v442
    %v444 = vmax.f32 %v443, 0.0
    %v445 = vld [vmem:[%s2] sm:$0x1]
    %v446 = vadd.f32 %v444, 1e-05
    %v447 = vrsqrt.pop %v446
    %v448 = vmul.f32 %v445, %v447
    %v449 = vld [vmem:[%s3] sm:$0x1]
    %v450 = vmul.f32 %v440, %v448
    %v451 = vsub.f32 %v449, %v450
    %v453 = vlaneseq
    %v454 = vshrl.u32 %v453, 7
    %v455 = vsub.s32 0, %v454
    %v456 = vrot.slane %v448, %v455
    %v458 = vmul.f32 %v422, %v456
    %v459 = vmul.f32 %v423, %v456
    %v461 = vlaneseq
    %v462 = vshrl.u32 %v461, 7
    %v463 = vsub.s32 0, %v462
    %v464 = vrot.slane %v451, %v463
    %v466 = vadd.f32 %v458, %v464
    %v467 = vadd.f32 %v459, %v464
    %v468 = vmax.f32 %v466, 0.0
    %v469 = vmax.f32 %v467, 0.0
    %470 = vst [vmem:[#allocation3] sm:$0x1] 0
    %471 = vst [vmem:[#allocation3 + $0x8] sm:$0x1] 0
    %472 = vst [vmem:[#allocation3 + $0x4] sm:$0x2] 0
    %473 = vst [vmem:[#allocation3 + $0xc] sm:$0x2] 0
    %v474 = vpack.c.bf16 %v468, %v468
    %v475 = vpack.c.bf16 %v469, %v469
    %v478 = vunpack.c.l.b16 %v474
    %v479 = vunpack.c.l.b16 %v475
    %v480 = vpack.c.b16 %v478, %v478
    %v481 = vpack.c.b16 %v479, %v479
    %v482 = vrot.slane %v480, 7
    %v483 = vrot.slane %v482, 4
    %v484 = vrot.slane %v481, 7
    %v485 = vrot.slane %v484, 4
    %490 = vst [vmem:[#allocation3] sm:$0xe] %v482
    %491 = vst [vmem:[#allocation3 + $0x4] sm:$0x1] %v483
    %492 = vst [vmem:[#allocation3 + $0x8] sm:$0xe] %v484
    %493 = vst [vmem:[#allocation3 + $0xc] sm:$0x1] %v485
    %v494 = vld [vmem:[#allocation3] sm:$0xf]
    %v495 = vld [vmem:[#allocation3 + $0x4] sm:$0x1]
    %v496 = vld [vmem:[#allocation3 + $0x8] sm:$0xf]
    %v497 = vld [vmem:[#allocation3 + $0xc] sm:$0x1]
    %vm498 = vsmask.f32 3328
    %vm499 = vsmask.f32 7440
    %vm500 = vmor %vm498, %vm499
    %v502 = vshrl.u32 %v494, 16
    %v504 = vrot.slane %v502, 4
    %v505 = vshll.u32 %v494, 16
    %v507 = vrot.slane %v505, 5
    %v508 = vor.u32 %v504, %v507
    %v509 = vrot.slane %v508, 4
    %v511 = vshll.u32 %v495, 16
    %v513 = vrot.slane %v511, 5
    %v514 = vsel %vm500, %v509, %v513
    %v516 = vshrl.u32 %v496, 16
    %v518 = vrot.slane %v516, 4
    %v519 = vshll.u32 %v496, 16
    %v521 = vrot.slane %v519, 5
    %v522 = vor.u32 %v518, %v521
    %v523 = vrot.slane %v522, 4
    %v525 = vshll.u32 %v497, 16
    %v527 = vrot.slane %v525, 5
    %v528 = vsel %vm500, %v523, %v527
    %v529 = vld [vmem:[#allocation3] sm:$0xe]
    %v530 = vld [vmem:[#allocation3 + $0x8] sm:$0xe]
    %vm535 = vcmask 1042432
    %vm536 = vcmask 1046532
    %vm537 = vmor %vm535, %vm536
    %v538 = vrot.slane %v529, 5
    %v539 = vrot.slane %v538, 4
    %v540 = vrot.slane %v495, 5
    %v541 = vsel %vm537, %v539, %v540
    %v542 = vrot.slane %v530, 5
    %v543 = vrot.slane %v542, 4
    %v544 = vrot.slane %v497, 5
    %v545 = vsel %vm537, %v543, %v544
    %v546 = vld [vmem:[#allocation3 + $0x4] sm:$0x3]
    %v547 = vld [vmem:[#allocation3 + $0xc] sm:$0x3]
    %vm548 = vsmask.f32 2304
    %vm549 = vsmask.f32 6416
    %vm550 = vmor %vm548, %vm549
    %v552 = vshrl.u32 %v529, 16
    %v554 = vrot.slane %v552, 5
    %v555 = vshll.u32 %v529, 16
    %v557 = vrot.slane %v555, 6
    %v558 = vor.u32 %v554, %v557
    %v559 = vrot.slane %v558, 4
    %v561 = vshrl.u32 %v546, 16
    %v563 = vrot.slane %v561, 5
    %v564 = vshll.u32 %v546, 16
    %v566 = vrot.slane %v564, 6
    %v567 = vor.u32 %v563, %v566
    %v568 = vsel %vm550, %v559, %v567
    %v570 = vshrl.u32 %v530, 16
    %v572 = vrot.slane %v570, 5
    %v573 = vshll.u32 %v530, 16
    %v575 = vrot.slane %v573, 6
    %v576 = vor.u32 %v572, %v575
    %v577 = vrot.slane %v576, 4
    %v579 = vshrl.u32 %v547, 16
    %v581 = vrot.slane %v579, 5
    %v582 = vshll.u32 %v547, 16
    %v584 = vrot.slane %v582, 6
    %v585 = vor.u32 %v581, %v584
    %v586 = vsel %vm550, %v577, %v585
    %v587 = vld [vmem:[#allocation7] sm:$0xf]
    %v588 = vld [vmem:[#allocation7 + $0x4] sm:$0xf]
    %v589 = vld [vmem:[#allocation7 + $0x8] sm:$0xf]
    %v590 = vld [vmem:[#allocation7 + $0xc] sm:$0xf]
    %v591 = vld [vmem:[#allocation7 + $0x10] sm:$0xf]
    %v592 = vld [vmem:[#allocation7 + $0x14] sm:$0xf]
    %v593 = vld [vmem:[#allocation7 + $0x18] sm:$0xf]
    %v594 = vld [vmem:[#allocation7 + $0x1c] sm:$0xf]
    %v595 = vld [vmem:[#allocation7 + $0x20] sm:$0xf]
    %v596 = vld [vmem:[#allocation7 + $0x24] sm:$0xf]
    %v597 = vld [vmem:[#allocation7 + $0x28] sm:$0xf]
    %v598 = vld [vmem:[#allocation7 + $0x2c] sm:$0xf]
    %v599 = vld [vmem:[#allocation7 + $0x30] sm:$0xf]
    %v600 = vld [vmem:[#allocation7 + $0x34] sm:$0xf]
    %v601 = vld [vmem:[#allocation7 + $0x38] sm:$0xf]
    %v602 = vld [vmem:[#allocation7 + $0x3c] sm:$0xf]
    %s603 = scalar_lea.vmem [#allocation7], 64
    %v604 = vld [vmem:[%s603] sm:$0xf]
    %v605 = vld [vmem:[%s603 + $0x4] sm:$0xf]
    %v606 = vld [vmem:[%s603 + $0x8] sm:$0xf]
    %v607 = vld [vmem:[%s603 + $0xc] sm:$0xf]
    %v608 = vld [vmem:[%s603 + $0x10] sm:$0xf]
    %v609 = vld [vmem:[%s603 + $0x14] sm:$0xf]
    %v610 = vld [vmem:[%s603 + $0x18] sm:$0xf]
    %v611 = vld [vmem:[%s603 + $0x1c] sm:$0xf]
    %v612 = vld [vmem:[%s603 + $0x20] sm:$0xf]
    %v613 = vld [vmem:[%s603 + $0x24] sm:$0xf]
    %v614 = vld [vmem:[%s603 + $0x28] sm:$0xf]
    %v615 = vld [vmem:[%s603 + $0x2c] sm:$0xf]
    %v616 = vld [vmem:[%s603 + $0x30] sm:$0xf]
    %v617 = vld [vmem:[%s603 + $0x34] sm:$0xf]
    %v618 = vld [vmem:[%s603 + $0x38] sm:$0xf]
    %v619 = vld [vmem:[%s603 + $0x3c] sm:$0xf]
    %v620 = vunpack.c.l.b16 %v541
    %v621 = vunpack.c.l.b16 %v545
    %v622 = vpack.c.b16 %v621, %v620
    %v640 = vunpack.c.l.b16 %v604
    %v641 = vunpack.c.l.b16 %v605
    %v642 = vunpack.c.l.b16 %v606
    %v643 = vunpack.c.l.b16 %v607
    %v644 = vunpack.c.l.b16 %v608
    %v645 = vunpack.c.l.b16 %v609
    %v646 = vunpack.c.l.b16 %v610
    %v647 = vunpack.c.l.b16 %v611
    %v648 = vunpack.c.l.b16 %v612
    %v649 = vunpack.c.l.b16 %v613
    %v650 = vunpack.c.l.b16 %v614
    %v651 = vunpack.c.l.b16 %v615
    %v652 = vunpack.c.l.b16 %v616
    %v653 = vunpack.c.l.b16 %v617
    %v654 = vunpack.c.l.b16 %v618
    %v655 = vunpack.c.l.b16 %v619
    %v656 = vpack.c.b16 %v641, %v640
    %v657 = vpack.c.b16 %v643, %v642
    %v658 = vpack.c.b16 %v645, %v644
    %v659 = vpack.c.b16 %v647, %v646
    %v660 = vpack.c.b16 %v649, %v648
    %v661 = vpack.c.b16 %v651, %v650
    %v662 = vpack.c.b16 %v653, %v652
    %v663 = vpack.c.b16 %v655, %v654
    %672 = vmatprep.subr.bf16.mxu0 0
    %673 = vmatpush1.bf16.msra.mxu0 %v656
    %674 = vmatprep.subr.bf16.mxu0 0
    %675 = vmatpush1.bf16.msra.mxu0 %v657
    %676 = vmatprep.subr.bf16.mxu0 0
    %677 = vmatpush1.bf16.msra.mxu0 %v658
    %678 = vmatprep.subr.bf16.mxu0 0
    %679 = vmatpush1.bf16.msra.mxu0 %v659
    %680 = vmatprep.subr.bf16.mxu0 0
    %681 = vmatpush1.bf16.msra.mxu0 %v660
    %682 = vmatprep.subr.bf16.mxu0 0
    %683 = vmatpush1.bf16.msra.mxu0 %v661
    %684 = vmatprep.subr.bf16.mxu0 0
    %685 = vmatpush1.bf16.msra.mxu0 %v662
    %686 = vmatprep.subr.bf16.mxu0 0
    %687 = vmatpush1.bf16.msra.mxu0 %v663
    %688 = vmatprep.subr.bf16.mxu0 0
    %689 = vmatpush1.bf16.msra.mxu0 0
    %690 = vmatprep.subr.bf16.mxu0 0
    %691 = vmatpush1.bf16.msra.mxu0 0
    %692 = vmatprep.subr.bf16.mxu0 0
    %693 = vmatpush1.bf16.msra.mxu0 0
    %694 = vmatprep.subr.bf16.mxu0 0
    %695 = vmatpush1.bf16.msra.mxu0 0
    %696 = vmatprep.subr.bf16.mxu0 0
    %697 = vmatpush1.bf16.msra.mxu0 0
    %698 = vmatprep.subr.bf16.mxu0 0
    %699 = vmatpush1.bf16.msra.mxu0 0
    %700 = vmatprep.subr.bf16.mxu0 0
    %701 = vmatpush1.bf16.msra.mxu0 0
    %702 = vmatprep.subr.bf16.mxu0 0
    %703 = vmatpush1.bf16.msra.mxu0 0
    %704 = vmatprep.mubr.bf16.mxu0 0
    %705 = vmatmul.mubr.bf16.gmra.mrb[0].mxu0 %v622
    %v706 = vpop.f32.mrb[0].mxu0
    %v707 = vadd.f32 0.0, %v706
    %v708 = vpop.f32.mrb[0].mxu0
    %v709 = vpop.f32.mrb[0].mxu0
    %v710 = vadd.f32 0.0, %v709
    %v711 = vpop.f32.mrb[0].mxu0
    %712 = vdwg.mxu0
    %v713 = vunpack.c.l.b16 %v514
    %v714 = vunpack.c.l.b16 %v528
    %v715 = vpack.c.b16 %v714, %v713
    %v733 = vunpack.c.l.b16 %v587
    %v734 = vunpack.c.l.b16 %v588
    %v735 = vunpack.c.l.b16 %v589
    %v736 = vunpack.c.l.b16 %v590
    %v737 = vunpack.c.l.b16 %v591
    %v738 = vunpack.c.l.b16 %v592
    %v739 = vunpack.c.l.b16 %v593
    %v740 = vunpack.c.l.b16 %v594
    %v741 = vunpack.c.l.b16 %v595
    %v742 = vunpack.c.l.b16 %v596
    %v743 = vunpack.c.l.b16 %v597
    %v744 = vunpack.c.l.b16 %v598
    %v745 = vunpack.c.l.b16 %v599
    %v746 = vunpack.c.l.b16 %v600
    %v747 = vunpack.c.l.b16 %v601
    %v748 = vunpack.c.l.b16 %v602
    %v749 = vpack.c.b16 %v734, %v733
    %v750 = vpack.c.b16 %v736, %v735
    %v751 = vpack.c.b16 %v738, %v737
    %v752 = vpack.c.b16 %v740, %v739
    %v753 = vpack.c.b16 %v742, %v741
    %v754 = vpack.c.b16 %v744, %v743
    %v755 = vpack.c.b16 %v746, %v745
    %v756 = vpack.c.b16 %v748, %v747
    %765 = vmatprep.subr.bf16.mxu0 0
    %766 = vmatpush1.bf16.msra.mxu0 %v749
    %767 = vmatprep.subr.bf16.mxu0 0
    %768 = vmatpush1.bf16.msra.mxu0 %v750
    %769 = vmatprep.subr.bf16.mxu0 0
    %770 = vmatpush1.bf16.msra.mxu0 %v751
    %771 = vmatprep.subr.bf16.mxu0 0
    %772 = vmatpush1.bf16.msra.mxu0 %v752
    %773 = vmatprep.subr.bf16.mxu0 0
    %774 = vmatpush1.bf16.msra.mxu0 %v753
    %775 = vmatprep.subr.bf16.mxu0 0
    %776 = vmatpush1.bf16.msra.mxu0 %v754
    %777 = vmatprep.subr.bf16.mxu0 0
    %778 = vmatpush1.bf16.msra.mxu0 %v755
    %779 = vmatprep.subr.bf16.mxu0 0
    %780 = vmatpush1.bf16.msra.mxu0 %v756
    %781 = vmatprep.subr.bf16.mxu0 0
    %782 = vmatpush1.bf16.msra.mxu0 0
    %783 = vmatprep.subr.bf16.mxu0 0
    %784 = vmatpush1.bf16.msra.mxu0 0
    %785 = vmatprep.subr.bf16.mxu0 0
    %786 = vmatpush1.bf16.msra.mxu0 0
    %787 = vmatprep.subr.bf16.mxu0 0
    %788 = vmatpush1.bf16.msra.mxu0 0
    %789 = vmatprep.subr.bf16.mxu0 0
    %790 = vmatpush1.bf16.msra.mxu0 0
    %791 = vmatprep.subr.bf16.mxu0 0
    %792 = vmatpush1.bf16.msra.mxu0 0
    %793 = vmatprep.subr.bf16.mxu0 0
    %794 = vmatpush1.bf16.msra.mxu0 0
    %795 = vmatprep.subr.bf16.mxu0 0
    %796 = vmatpush1.bf16.msra.mxu0 0
    %797 = vmatprep.mubr.bf16.mxu0 0
    %798 = vmatmul.mubr.bf16.gmra.mrb[0].mxu0 %v715
    %v799 = vpop.f32.mrb[0].mxu0
    %v800 = vadd.f32 %v707, %v799
    %v801 = vpop.f32.mrb[0].mxu0
    %v802 = vpop.f32.mrb[0].mxu0
    %v803 = vadd.f32 %v710, %v802
    %v804 = vpop.f32.mrb[0].mxu0
    %805 = vdwg.mxu0
    %s806 = scalar_lea.vmem [#allocation7], 128
    %v807 = vld [vmem:[%s806] sm:$0xf]
    %v808 = vld [vmem:[%s806 + $0x4] sm:$0xf]
    %v809 = vld [vmem:[%s806 + $0x8] sm:$0xf]
    %v810 = vld [vmem:[%s806 + $0xc] sm:$0xf]
    %v811 = vld [vmem:[%s806 + $0x10] sm:$0xf]
    %v812 = vld [vmem:[%s806 + $0x14] sm:$0xf]
    %v813 = vld [vmem:[%s806 + $0x18] sm:$0xf]
    %v814 = vld [vmem:[%s806 + $0x1c] sm:$0xf]
    %v815 = vld [vmem:[%s806 + $0x20] sm:$0xf]
    %v816 = vld [vmem:[%s806 + $0x24] sm:$0xf]
    %v817 = vld [vmem:[%s806 + $0x28] sm:$0xf]
    %v818 = vld [vmem:[%s806 + $0x2c] sm:$0xf]
    %v819 = vld [vmem:[%s806 + $0x30] sm:$0xf]
    %v820 = vld [vmem:[%s806 + $0x34] sm:$0xf]
    %v821 = vld [vmem:[%s806 + $0x38] sm:$0xf]
    %v822 = vld [vmem:[%s806 + $0x3c] sm:$0xf]
    %v823 = vunpack.c.l.b16 %v568
    %v824 = vunpack.c.l.b16 %v586
    %v825 = vpack.c.b16 %v824, %v823
    %v843 = vunpack.c.l.b16 %v807
    %v844 = vunpack.c.l.b16 %v808
    %v845 = vunpack.c.l.b16 %v809
    %v846 = vunpack.c.l.b16 %v810
    %v847 = vunpack.c.l.b16 %v811
    %v848 = vunpack.c.l.b16 %v812
    %v849 = vunpack.c.l.b16 %v813
    %v850 = vunpack.c.l.b16 %v814
    %v851 = vunpack.c.l.b16 %v815
    %v852 = vunpack.c.l.b16 %v816
    %v853 = vunpack.c.l.b16 %v817
    %v854 = vunpack.c.l.b16 %v818
    %v855 = vunpack.c.l.b16 %v819
    %v856 = vunpack.c.l.b16 %v820
    %v857 = vunpack.c.l.b16 %v821
    %v858 = vunpack.c.l.b16 %v822
    %v859 = vpack.c.b16 %v844, %v843
    %v860 = vpack.c.b16 %v846, %v845
    %v861 = vpack.c.b16 %v848, %v847
    %v862 = vpack.c.b16 %v850, %v849
    %v863 = vpack.c.b16 %v852, %v851
    %v864 = vpack.c.b16 %v854, %v853
    %v865 = vpack.c.b16 %v856, %v855
    %v866 = vpack.c.b16 %v858, %v857
    %875 = vmatprep.subr.bf16.mxu0 0
    %876 = vmatpush1.bf16.msra.mxu0 %v859
    %877 = vmatprep.subr.bf16.mxu0 0
    %878 = vmatpush1.bf16.msra.mxu0 %v860
    %879 = vmatprep.subr.bf16.mxu0 0
    %880 = vmatpush1.bf16.msra.mxu0 %v861
    %881 = vmatprep.subr.bf16.mxu0 0
    %882 = vmatpush1.bf16.msra.mxu0 %v862
    %883 = vmatprep.subr.bf16.mxu0 0
    %884 = vmatpush1.bf16.msra.mxu0 %v863
    %885 = vmatprep.subr.bf16.mxu0 0
    %886 = vmatpush1.bf16.msra.mxu0 %v864
    %887 = vmatprep.subr.bf16.mxu0 0
    %888 = vmatpush1.bf16.msra.mxu0 %v865
    %889 = vmatprep.subr.bf16.mxu0 0
    %890 = vmatpush1.bf16.msra.mxu0 %v866
    %891 = vmatprep.subr.bf16.mxu0 0
    %892 = vmatpush1.bf16.msra.mxu0 0
    %893 = vmatprep.subr.bf16.mxu0 0
    %894 = vmatpush1.bf16.msra.mxu0 0
    %895 = vmatprep.subr.bf16.mxu0 0
    %896 = vmatpush1.bf16.msra.mxu0 0
    %897 = vmatprep.subr.bf16.mxu0 0
    %898 = vmatpush1.bf16.msra.mxu0 0
    %899 = vmatprep.subr.bf16.mxu0 0
    %900 = vmatpush1.bf16.msra.mxu0 0
    %901 = vmatprep.subr.bf16.mxu0 0
    %902 = vmatpush1.bf16.msra.mxu0 0
    %903 = vmatprep.subr.bf16.mxu0 0
    %904 = vmatpush1.bf16.msra.mxu0 0
    %905 = vmatprep.subr.bf16.mxu0 0
    %906 = vmatpush1.bf16.msra.mxu0 0
    %907 = vmatprep.mubr.bf16.mxu0 0
    %908 = vmatmul.mubr.bf16.gmra.mrb[0].mxu0 %v825
    %v909 = vpop.f32.mrb[0].mxu0
    %v910 = vadd.f32 0.0, %v909
    %v911 = vpop.f32.mrb[0].mxu0
    %v912 = vpop.f32.mrb[0].mxu0
    %v913 = vadd.f32 0.0, %v912
    %v914 = vpop.f32.mrb[0].mxu0
    %915 = vdwg.mxu0
    %v916 = vadd.f32 %v800, %v910
    %v917 = vadd.f32 %v803, %v913
    %v918 = vadd.f32 %v916, %v917
    %v919 = vrot.slane %v918, 4
    %v920 = vadd.f32 %v918, %v919
    %v921 = vrot.slane %v920, 2
    %v922 = vadd.f32 %v920, %v921
    %v923 = vrot.slane %v922, 1
    %v924 = vadd.f32 %v922, %v923
    %v925 = vmul.f32 %v916, %v916
    %v926 = vmul.f32 %v917, %v917
    %v927 = vadd.f32 %v925, %v926
    %v928 = vrot.slane %v927, 4
    %v929 = vadd.f32 %v927, %v928
    %v930 = vrot.slane %v929, 2
    %v931 = vadd.f32 %v929, %v930
    %v932 = vrot.slane %v931, 1
    %v933 = vadd.f32 %v931, %v932
    %v934 = vmul.f32 %v924, 0.0625
    %v935 = vmul.f32 %v933, 0.0625
    %v936 = vmul.f32 %v934, %v934
    %v937 = vsub.f32 %v935, %v936
    %v938 = vmax.f32 %v937, 0.0
    %v939 = vld [vmem:[%s5] sm:$0x1]
    %v940 = vadd.f32 %v938, 1e-05
    %v941 = vrsqrt.pop %v940
    %v942 = vmul.f32 %v939, %v941
    %v943 = vld [vmem:[%s6] sm:$0x1]
    %v944 = vmul.f32 %v934, %v942
    %v945 = vsub.f32 %v943, %v944
    %v947 = vlaneseq
    %v948 = vshrl.u32 %v947, 7
    %v949 = vsub.s32 0, %v948
    %v950 = vrot.slane %v942, %v949
    %v952 = vmul.f32 %v916, %v950
    %v953 = vmul.f32 %v917, %v950
    %v955 = vlaneseq
    %v956 = vshrl.u32 %v955, 7
    %v957 = vsub.s32 0, %v956
    %v958 = vrot.slane %v945, %v957
    %v960 = vadd.f32 %v952, %v958
    %v961 = vadd.f32 %v953, %v958
    %v962 = vld [vmem:[#allocation9] sm:$0xf]
    %v963 = vld [vmem:[#allocation9 + $0x4] sm:$0xf]
    %v964 = vld [vmem:[#allocation9 + $0x8] sm:$0xf]
    %v965 = vld [vmem:[#allocation9 + $0xc] sm:$0xf]
    %v966 = vld [vmem:[#allocation9 + $0x10] sm:$0xf]
    %v967 = vld [vmem:[#allocation9 + $0x14] sm:$0xf]
    %v968 = vld [vmem:[#allocation9 + $0x18] sm:$0xf]
    %v969 = vld [vmem:[#allocation9 + $0x1c] sm:$0xf]
    %v970 = vld [vmem:[#allocation9 + $0x20] sm:$0xf]
    %v971 = vld [vmem:[#allocation9 + $0x24] sm:$0xf]
    %v972 = vld [vmem:[#allocation9 + $0x28] sm:$0xf]
    %v973 = vld [vmem:[#allocation9 + $0x2c] sm:$0xf]
    %v974 = vld [vmem:[#allocation9 + $0x30] sm:$0xf]
    %v975 = vld [vmem:[#allocation9 + $0x34] sm:$0xf]
    %v976 = vld [vmem:[#allocation9 + $0x38] sm:$0xf]
    %v977 = vld [vmem:[#allocation9 + $0x3c] sm:$0xf]
    %v994 = vunpack.c.l.b16 %v962
    %v995 = vunpack.c.l.b16 %v963
    %v996 = vunpack.c.l.b16 %v964
    %v997 = vunpack.c.l.b16 %v965
    %v998 = vunpack.c.l.b16 %v966
    %v999 = vunpack.c.l.b16 %v967
    %v1000 = vunpack.c.l.b16 %v968
    %v1001 = vunpack.c.l.b16 %v969
    %v1002 = vunpack.c.l.b16 %v970
    %v1003 = vunpack.c.l.b16 %v971
    %v1004 = vunpack.c.l.b16 %v972
    %v1005 = vunpack.c.l.b16 %v973
    %v1006 = vunpack.c.l.b16 %v974
    %v1007 = vunpack.c.l.b16 %v975
    %v1008 = vunpack.c.l.b16 %v976
    %v1009 = vunpack.c.l.b16 %v977
    %v1010 = vpack.c.b16 %v995, %v994
    %v1011 = vpack.c.b16 %v997, %v996
    %v1012 = vpack.c.b16 %v999, %v998
    %v1013 = vpack.c.b16 %v1001, %v1000
    %v1014 = vpack.c.b16 %v1003, %v1002
    %v1015 = vpack.c.b16 %v1005, %v1004
    %v1016 = vpack.c.b16 %v1007, %v1006
    %v1017 = vpack.c.b16 %v1009, %v1008
    %1026 = vmatprep.subr.bf16.mxu0 0
    %1027 = vmatpush1.bf16.msra.mxu0 %v1010
    %1028 = vmatprep.subr.bf16.mxu0 0
    %1029 = vmatpush1.bf16.msra.mxu0 %v1011
    %1030 = vmatprep.subr.bf16.mxu0 0
    %1031 = vmatpush1.bf16.msra.mxu0 %v1012
    %1032 = vmatprep.subr.bf16.mxu0 0
    %1033 = vmatpush1.bf16.msra.mxu0 %v1013
    %1034 = vmatprep.subr.bf16.mxu0 0
    %1035 = vmatpush1.bf16.msra.mxu0 %v1014
    %1036 = vmatprep.subr.bf16.mxu0 0
    %1037 = vmatpush1.bf16.msra.mxu0 %v1015
    %1038 = vmatprep.subr.bf16.mxu0 0
    %1039 = vmatpush1.bf16.msra.mxu0 %v1016
    %1040 = vmatprep.subr.bf16.mxu0 0
    %1041 = vmatpush1.bf16.msra.mxu0 %v1017
    %1042 = vmatprep.subr.bf16.mxu0 0
    %1043 = vmatpush1.bf16.msra.mxu0 0
    %1044 = vmatprep.subr.bf16.mxu0 0
    %1045 = vmatpush1.bf16.msra.mxu0 0
    %1046 = vmatprep.subr.bf16.mxu0 0
    %1047 = vmatpush1.bf16.msra.mxu0 0
    %1048 = vmatprep.subr.bf16.mxu0 0
    %1049 = vmatpush1.bf16.msra.mxu0 0
    %1050 = vmatprep.subr.bf16.mxu0 0
    %1051 = vmatpush1.bf16.msra.mxu0 0
    %1052 = vmatprep.subr.bf16.mxu0 0
    %1053 = vmatpush1.bf16.msra.mxu0 0
    %1054 = vmatprep.subr.bf16.mxu0 0
    %1055 = vmatpush1.bf16.msra.mxu0 0
    %1056 = vmatprep.subr.bf16.mxu0 0
    %1057 = vmatpush1.bf16.msra.mxu0 0
    %1058 = vmatprep.mubr.bf16.mxu0 0
    %1059 = vmatmul.mubr.bf16.gmra.mrb[0].mxu0 %v99
    %v1060 = vpop.f32.mrb[0].mxu0
    %v1061 = vadd.f32 0.0, %v1060
    %v1062 = vpop.f32.mrb[0].mxu0
    %v1063 = vpop.f32.mrb[0].mxu0
    %v1064 = vadd.f32 0.0, %v1063
    %v1065 = vpop.f32.mrb[0].mxu0
    %1066 = vdwg.mxu0
    %v1067 = vadd.f32 %v1061, %v1064
    %v1068 = vrot.slane %v1067, 4
    %v1069 = vadd.f32 %v1067, %v1068
    %v1070 = vrot.slane %v1069, 2
    %v1071 = vadd.f32 %v1069, %v1070
    %v1072 = vrot.slane %v1071, 1
    %v1073 = vadd.f32 %v1071, %v1072
    %v1074 = vmul.f32 %v1061, %v1061
    %v1075 = vmul.f32 %v1064, %v1064
    %v1076 = vadd.f32 %v1074, %v1075
    %v1077 = vrot.slane %v1076, 4
    %v1078 = vadd.f32 %v1076, %v1077
    %v1079 = vrot.slane %v1078, 2
    %v1080 = vadd.f32 %v1078, %v1079
    %v1081 = vrot.slane %v1080, 1
    %v1082 = vadd.f32 %v1080, %v1081
    %v1083 = vmul.f32 %v1073, 0.0625
    %v1084 = vmul.f32 %v1082, 0.0625
    %v1085 = vmul.f32 %v1083, %v1083
    %v1086 = vsub.f32 %v1084, %v1085
    %v1087 = vmax.f32 %v1086, 0.0
    %v1088 = vld [vmem:[%s8] sm:$0x1]
    %v1089 = vadd.f32 %v1087, 1e-05
    %v1090 = vrsqrt.pop %v1089
    %v1091 = vmul.f32 %v1088, %v1090
    %v1092 = vld [vmem:[%s9] sm:$0x1]
    %v1093 = vmul.f32 %v1083, %v1091
    %v1094 = vsub.f32 %v1092, %v1093
    %v1096 = vlaneseq
    %v1097 = vshrl.u32 %v1096, 7
    %v1098 = vsub.s32 0, %v1097
    %v1099 = vrot.slane %v1091, %v1098
    %v1101 = vmul.f32 %v1061, %v1099
    %v1102 = vmul.f32 %v1064, %v1099
    %v1104 = vlaneseq
    %v1105 = vshrl.u32 %v1104, 7
    %v1106 = vsub.s32 0, %v1105
    %v1107 = vrot.slane %v1094, %v1106
    %v1109 = vadd.f32 %v1101, %v1107
    %v1110 = vadd.f32 %v1102, %v1107
    %v1111 = vadd.f32 %v960, %v1109
    %v1112 = vadd.f32 %v961, %v1110
    %v1113 = vmax.f32 %v1111, 0.0
    %v1114 = vmax.f32 %v1112, 0.0
    %v1115 = vpack.c.bf16 %v1113, %v1113
    %v1116 = vpack.c.bf16 %v1114, %v1114
    %1117 = vst [vmem:[#allocation10] sm:$0xf] %v1115
    %1118 = vst [vmem:[#allocation10 + $0x4] sm:$0xf] %v1116
    // Predicated region
    $region51: #{tpu_custom_call.1} parent=1 // pred_check
      _
    $region52: #{tpu_custom_call.1} parent=1 // pred_check_branch
      %1120 = sbr.rel (0) target = $region54
    $region53: #{tpu_custom_call.1} parent=1 // pred_region
      %s1122 = ssub.s32 128, 128
      %1123 = vsyncadd [#allocation6], %s1122
      %s1124 = sshll.u32 [#allocation10], 4
      %s1125 = int_to_ptr.vmem [resolvable:$true] %s1124
      %1130 = dma.vmem_to_hbm [thread:$0]  %s1125, 128, %s10, [#allocation6], 64, 64, 4
    $region54: #{tpu_custom_call.1} parent=1 // pred_fallthru
      _
    // Predicated region
    $region55: #{tpu_custom_call.1} parent=1 // pred_check
      _
    $region56: #{tpu_custom_call.1} parent=1 // pred_check_branch
      %1132 = sbr.rel (0) target = $region58
    $region57: #{tpu_custom_call.1} parent=1 // pred_region
      %1133 = dma.done [#allocation6], 128
    $region58: #{tpu_custom_call.1} parent=1 // pred_fallthru
      _
    %1134 = vsyncpa [#allocation5], 1
    %1135 = vsyncpa [#allocation8], 1
    %1136 = vsyncpa [#allocation6], 1

</llo_original>
